<compile_context>
chip_gen: v7x
topology: tpu7x:2x2x1
jax: 0.10.0
libtpu: 0.0.40
codegen_flags: <defaults>
</compile_context>

<pallas_src>
from functools import lru_cache, partial

import jax
import jax.numpy as jnp
from jax.experimental import pallas as pl
from jax.experimental.pallas import tpu as pltpu

_MIB = 1024 * 1024


# ---------------------------------------------------------------------------
# Kernels
# ---------------------------------------------------------------------------
def _scse_fused_kernel(x_ref, w1_ref, b1_ref, w2_ref, b2_ref, ws_ref, bs_ref,
                       o_ref):
    """Single-pass SCSE for one sample.  x_ref block: (C, HW), f32."""
    x = x_ref[...]                                                # (C, HW)

    # ---- cSE: GAP over spatial (lane reduce) + tiny 2-layer MLP ------------
    gap = jnp.mean(x, axis=1, keepdims=True)                      # (C, 1)
    # 1x1 conv C->Cr as elementwise mul + sublane reduce (off the MXU)
    h = jnp.sum(w1_ref[...] * gap, axis=0, keepdims=True) + b1_ref[...]    # (1, Cr)
    h = jnp.maximum(h, 0.0)                                       # ReLU
    # 1x1 conv Cr->C as elementwise mul + lane reduce
    c_lin = jnp.sum(w2_ref[...] * h, axis=1, keepdims=True) + b2_ref[...]  # (C, 1)
    c_att = jax.nn.sigmoid(c_lin)                                 # (C, 1)

    # ---- sSE: 1x1 conv C->1 as elementwise mul + sublane reduce ------------
    s_lin = jnp.sum(ws_ref[...] * x, axis=0, keepdims=True) + bs_ref[...]  # (1, HW)
    s_att = jax.nn.sigmoid(s_lin)                                 # (1, HW)

    # ---- fused combine: x*cSE + x*sSE == x * (cSE + sSE) -------------------
    o_ref[...] = x * (c_att + s_att)


def _scse_apply_kernel(c_ref, x_ref, ws_ref, bs_ref, o_ref):
    """Apply phase of the spatially tiled path.  x_ref block: (C, THW)."""
    x = x_ref[...]
    s_att = jax.nn.sigmoid(
        jnp.sum(ws_ref[...] * x, axis=0, keepdims=True) + bs_ref[...])
    o_ref[...] = x * (c_ref[...] + s_att)


# ---------------------------------------------------------------------------
# Per-generation VMEM / tiling policy
# ---------------------------------------------------------------------------
@lru_cache(maxsize=1)
def _vmem_policy():
    """Return (scoped_vmem_limit_bytes, single_pass_budget_bytes)."""
    vmem_cap = 64 * _MIB            # conservative default (v7x per-TC VMEM)
    try:
        info = pltpu.get_tpu_info()
        for attr in ("vmem_capacity_bytes", "vmem_bytes", "vmem_size_bytes"):
            v = getattr(info, attr, None)
            if v:
                vmem_cap = int(v)
                break
    except Exception:
        pass
    # Scoped limit: 3/4 of physical, capped at 96 MiB (headroom for params,
    # stack, compiler scratch).  128 MiB chips -> 96 MiB, v7x (64 MiB) -> 48.
    vmem_limit = max(32 * _MIB, min((vmem_cap * 3) // 4, 96 * _MIB))
    # Single-pass path needs ~6 block-sized buffers: 2x in + 2x out double
    # buffers plus in-kernel block-sized temporaries (ws*x, output staging).
    single_pass_budget = (vmem_limit * 3) // 4
    return vmem_limit, single_pass_budget


def _round_up(v, m):
    return ((v + m - 1) // m) * m


def _pick_hw_tile(hw_pad, c, itemsize, vmem_limit, min_tiles=1):
    """Largest multiple-of-128 tile dividing hw_pad such that ~6 tile-sized
    buffers fit under the scoped limit; targets multi-MiB per-step traffic so
    the ~0.35us per-grid-step overhead stays negligible even at v7x HBM BW."""
    max_tile_bytes = max(vmem_limit // 8, 2 * _MIB)
    max_thw = max((max_tile_bytes // (c * itemsize)) // 128 * 128, 128)
    if min_tiles >= 2:
        max_thw = min(max_thw, max((hw_pad // min_tiles) // 128 * 128, 128))
    max_thw = min(max_thw, hw_pad)
    best = 128
    t = 128
    while t <= max_thw:
        if hw_pad % t == 0:
            best = t
        t += 128
    return best


def _maybe_buffered_spec(block_shape, index_map, n_buffers):
    """BlockSpec with deeper pipelining when small tiles expose DMA latency."""
    if n_buffers > 2:
        try:
            return pl.BlockSpec(block_shape, index_map,
                                pipeline_mode=pl.Buffered(n_buffers))
        except TypeError:   # BlockSpec without pipeline_mode support
            pass
    return pl.BlockSpec(block_shape, index_map)


# ---------------------------------------------------------------------------
# Wrappers
# ---------------------------------------------------------------------------
def _scse_single_pass(x3, params, vmem_limit):
    """One grid step per sample; whole (C, HW) slab resident in VMEM."""
    w1t, b1, w2, b2, ws, bs = params
    N, C, HW = x3.shape
    Cr = w1t.shape[1]
    full = lambda shape: pl.BlockSpec(shape, lambda n: (0,) * len(shape))
    return pl.pallas_call(
        _scse_fused_kernel,
        out_shape=jax.ShapeDtypeStruct((N, C, HW), x3.dtype),
        grid=(N,),
        in_specs=[
            pl.BlockSpec((None, C, HW), lambda n: (n, 0, 0)),   # x (kernel sees (C, HW))
            full((C, Cr)),                                      # W1^T
            full((1, Cr)),                                      # b1
            full((C, Cr)),                                      # W2
            full((C, 1)),                                       # b2
            full((C, 1)),                                       # Ws^T
            full((1, 1)),                                       # bs
        ],
        out_specs=pl.BlockSpec((None, C, HW), lambda n: (n, 0, 0)),
        compiler_params=pltpu.CompilerParams(
            dimension_semantics=("parallel",),
            vmem_limit_bytes=vmem_limit),
    )(x3, w1t, b1, w2, b2, ws, bs)


def _scse_tiled(x3, params, hw_pad, thw, vmem_limit):
    """Two-phase path: tiny per-sample c_att precompute, then a lane-dense
    apply kernel tiled over spatial so (N, n_tiles) is a parallel grid."""
    w1t, b1, w2, b2, ws, bs = params
    N, C, HW = x3.shape
    itemsize = jnp.dtype(x3.dtype).itemsize

    # Tiny (N, C) cSE precompute (GAP + 2-layer MLP); negligible FLOPs but an
    # extra HBM read of x.
    # TODO(synk): fold the GAP into the producing op (or a Pallas reduction
    # pass) if this path ever dominates; the per-gen budgets keep most shapes
    # on the 2-pass single-pass path instead.
    gap = jnp.mean(x3, axis=2)                                   # (N, C)
    h = jnp.maximum(gap @ w1t + b1[0], 0.0)                      # (N, Cr)
    c_att = jax.nn.sigmoid(h @ w2.T + b2[:, 0])[:, :, None]      # (N, C, 1)

    if hw_pad != HW:
        # Pad spatial to a multiple of 128: stores stay lane-dense/unmasked
        # and VMEM stays bounded (no full-HW fallback block).  Padded columns
        # are zero and sliced off below.
        x3 = jnp.pad(x3, ((0, 0), (0, 0), (0, hw_pad - HW)))

    n_t = hw_pad // thw
    tile_bytes = C * thw * itemsize
    n_buffers = 3 if (n_t >= 2 and tile_bytes < 2 * _MIB) else 2
    x_spec = _maybe_buffered_spec((None, C, thw), lambda n, t: (n, 0, t),
                                  n_buffers)

    out3 = pl.pallas_call(
        _scse_apply_kernel,
        out_shape=jax.ShapeDtypeStruct((N, C, hw_pad), x3.dtype),
        grid=(N, n_t),
        in_specs=[
            pl.BlockSpec((None, C, 1), lambda n, t: (n, 0, 0)),   # c_att
            x_spec,                                               # x tile
            pl.BlockSpec((C, 1), lambda n, t: (0, 0)),            # Ws^T
            pl.BlockSpec((1, 1), lambda n, t: (0, 0)),            # bs
        ],
        out_specs=pl.BlockSpec((None, C, thw), lambda n, t: (n, 0, t)),
        compiler_params=pltpu.CompilerParams(
            dimension_semantics=("parallel", "parallel"),
            vmem_limit_bytes=vmem_limit),
    )(c_att, x3, ws, bs)

    if hw_pad != HW:
        out3 = out3[:, :, :HW]
    return out3


@partial(jax.jit, static_argnums=(2, 3))
def scse_pallas(x_nchw, params, force_tiled=False, hw_tile=None):
    """SCSE forward on NCHW input.  x_nchw: (N, C, H, W) float32.

    `force_tiled` / `hw_tile` are test/debug knobs only; the default dispatch
    picks the path and tile size from the per-generation VMEM policy.
    """
    N, C, H, W = x_nchw.shape
    HW = H * W
    itemsize = jnp.dtype(x_nchw.dtype).itemsize
    x3 = x_nchw.reshape(N, C, HW)      # free: contiguous collapse, no transpose

    vmem_limit, sp_budget = _vmem_policy()
    block_bytes = C * HW * itemsize

    # N-aware dispatch: with grid=(N,) and N==1, one v7x TensorCore idles and
    # each core has a single grid step (DMA fully exposed).  Route big
    # single-sample slabs to the (N, n_tiles) parallel grid instead.
    prefer_tiled_small_n = (N == 1) and (block_bytes >= 4 * _MIB)

    single_pass = (hw_tile is None and not force_tiled
                   and not prefer_tiled_small_n
                   and 6 * block_bytes <= sp_budget)

    if single_pass:
        out3 = _scse_single_pass(x3, params, vmem_limit)
    else:
        hw_pad = _round_up(HW, 128)
        if hw_tile is not None:
            thw = min(_round_up(hw_tile, 128), hw_pad)
            if hw_pad % thw != 0:
                thw = _pick_hw_tile(hw_pad, C, itemsize, vmem_limit)
        else:
            thw = _pick_hw_tile(hw_pad, C, itemsize, vmem_limit,
                                min_tiles=2 if prefer_tiled_small_n else 1)
        out3 = _scse_tiled(x3, params, hw_pad, thw, vmem_limit)

    return out3.reshape(N, C, H, W)


# ---------------------------------------------------------------------------
# Reference + params (mirrors the PyTorch SCSEModule forward)
# ---------------------------------------------------------------------------
def scse_reference(x, params):
    """Pure-JAX reference, NCHW, same weight layout as the kernel."""
    w1t, b1, w2, b2, ws, bs = params
    gap = jnp.mean(x, axis=(2, 3))                               # (N, C)
    h = jnp.maximum(gap @ w1t + b1[0], 0.0)                      # (N, Cr)
    c_att = jax.nn.sigmoid(h @ w2.T + b2[:, 0])                  # (N, C)
    s_att = jax.nn.sigmoid(jnp.einsum('nchw,co->nohw', x, ws) + bs[0, 0])  # (N,1,H,W)
    return x * c_att[:, :, None, None] + x * s_att


def init_params(key, in_channels, reduction=16):
    """1x1 conv weights stored in kernel layout:
       w1t[c, r] = conv1.weight[r, c]   (C, Cr)
       w2[c, r]  = conv2.weight[c, r]   (C, Cr)
       ws[c, 0]  = sSE.weight[0, c]     (C, 1)
    """
    cr = max(in_channels // reduction, 1)
    ks = jax.random.split(key, 6)
    w1t = jax.random.normal(ks[0], (in_channels, cr), jnp.float32) * 0.1
    b1 = jax.random.normal(ks[1], (1, cr), jnp.float32) * 0.1
    w2 = jax.random.normal(ks[2], (in_channels, cr), jnp.float32) * 0.1
    b2 = jax.random.normal(ks[3], (in_channels, 1), jnp.float32) * 0.1
    ws = jax.random.normal(ks[4], (in_channels, 1), jnp.float32) * 0.1
    bs = jax.random.normal(ks[5], (1, 1), jnp.float32) * 0.1
    return (w1t, b1, w2, b2, ws, bs)


if __name__ == "__main__":
    key = jax.random.PRNGKey(0)
    kx, kp, kx2, kp2 = jax.random.split(key, 4)

    # Small decoder-stage shape; C=32 so C // reduction(16) = 2.
    N, C, H, W = 2, 32, 16, 16
    x = jax.random.normal(kx, (N, C, H, W), jnp.float32)
    params = init_params(kp, C, reduction=16)
    ref = scse_reference(x, params)

    # Default dispatch (single-pass path for this shape).
    out = jax.block_until_ready(scse_pallas(x, params))
    assert out.shape == (N, C, H, W)
    assert jnp.allclose(out, ref, atol=1e-5, rtol=1e-5), "single-pass mismatch"

    # Forced tiled path: exercises the budget-/C-aware tile chooser + apply kernel.
    out_t = jax.block_until_ready(scse_pallas(x, params, True))
    assert jnp.allclose(out_t, ref, atol=1e-5, rtol=1e-5), "tiled-path mismatch"

    # Forced small tile (test-only): exercises the deeper-buffered small-tile path.
    out_s = jax.block_until_ready(scse_pallas(x, params, True, 128))
    assert jnp.allclose(out_s, ref, atol=1e-5, rtol=1e-5), "small-tile mismatch"

    # Non-128-multiple spatial size: exercises the pad-to-128 path
    # (replaces the old thw=HW fallback).
    N2, C2, H2, W2 = 1, 16, 10, 10
    x2 = jax.random.normal(kx2, (N2, C2, H2, W2), jnp.float32)
    params2 = init_params(kp2, C2, reduction=16)
    ref2 = scse_reference(x2, params2)
    out2 = jax.block_until_ready(scse_pallas(x2, params2, True))
    assert jnp.allclose(out2, ref2, atol=1e-5, rtol=1e-5), "padded-path mismatch"

    print("KERNEL_OK")
</pallas_src>

<mosaic_0001>
module attributes {stable_mosaic.version = 11 : i64} {
  func.func @_scse_fused_kernel(%arg0: i32, %arg1: memref<1x32x256xf32, #tpu.memory_space<vmem>>, %arg2: memref<32x2xf32, #tpu.memory_space<vmem>>, %arg3: memref<1x2xf32, #tpu.memory_space<vmem>>, %arg4: memref<32x2xf32, #tpu.memory_space<vmem>>, %arg5: memref<32x1xf32, #tpu.memory_space<vmem>>, %arg6: memref<32x1xf32, #tpu.memory_space<vmem>>, %arg7: memref<1x1xf32, #tpu.memory_space<vmem>>, %arg8: memref<1x32x256xf32, #tpu.memory_space<vmem>>) attributes {dimension_semantics = [#tpu.dimension_semantics<parallel>], iteration_bounds = array<i64: 2>, scalar_prefetch = 0 : i64, scratch_operands = 0 : i64, tpu.core_type = #tpu.core_type<tc>, window_params = [{transform_indices = @transform_0, window_bounds = array<i64: 1, 32, 256>}, {pipeline_mode = #tpu.pipeline_mode<synchronous>, transform_indices = @transform_1, window_bounds = array<i64: 32, 2>}, {pipeline_mode = #tpu.pipeline_mode<synchronous>, transform_indices = @transform_2, window_bounds = array<i64: 1, 2>}, {pipeline_mode = #tpu.pipeline_mode<synchronous>, transform_indices = @transform_3, window_bounds = array<i64: 32, 2>}, {pipeline_mode = #tpu.pipeline_mode<synchronous>, transform_indices = @transform_4, window_bounds = array<i64: 32, 1>}, {pipeline_mode = #tpu.pipeline_mode<synchronous>, transform_indices = @transform_5, window_bounds = array<i64: 32, 1>}, {pipeline_mode = #tpu.pipeline_mode<synchronous>, transform_indices = @transform_6, window_bounds = array<i64: 1, 1>}, {transform_indices = @transform_7, window_bounds = array<i64: 1, 32, 256>}]} {
    %c0 = arith.constant 0 : index
    %c0_0 = arith.constant 0 : index
    %c0_1 = arith.constant 0 : index
    %0 = vector.load %arg1[%c0, %c0_0, %c0_1] : memref<1x32x256xf32, #tpu.memory_space<vmem>>, vector<1x32x256xf32>
    %1 = vector.shape_cast %0 : vector<1x32x256xf32> to vector<32x256xf32>
    %cst = arith.constant dense<0.000000e+00> : vector<32xf32>
    %2 = vector.multi_reduction <add>, %1, %cst [1] : vector<32x256xf32> to vector<32xf32>
    %3 = vector.shape_cast %2 : vector<32xf32> to vector<32x1xf32>
    %cst_2 = arith.constant 2.560000e+02 : f32
    %4 = vector.broadcast %cst_2 : f32 to vector<32x1xf32>
    %5 = arith.divf %3, %4 : vector<32x1xf32>
    %c0_3 = arith.constant 0 : index
    %c0_4 = arith.constant 0 : index
    %6 = vector.load %arg2[%c0_3, %c0_4] : memref<32x2xf32, #tpu.memory_space<vmem>>, vector<32x2xf32>
    %7 = vector.broadcast %5 : vector<32x1xf32> to vector<32x2xf32>
    %8 = arith.mulf %6, %7 : vector<32x2xf32>
    %cst_5 = arith.constant dense<0.000000e+00> : vector<2xf32>
    %9 = vector.multi_reduction <add>, %8, %cst_5 [0] : vector<32x2xf32> to vector<2xf32>
    %10 = vector.shape_cast %9 : vector<2xf32> to vector<1x2xf32>
    %c0_6 = arith.constant 0 : index
    %c0_7 = arith.constant 0 : index
    %11 = vector.load %arg3[%c0_6, %c0_7] : memref<1x2xf32, #tpu.memory_space<vmem>>, vector<1x2xf32>
    %12 = arith.addf %10, %11 : vector<1x2xf32>
    %cst_8 = arith.constant 0.000000e+00 : f32
    %13 = vector.broadcast %cst_8 : f32 to vector<1x2xf32>
    %14 = arith.maximumf %12, %13 : vector<1x2xf32>
    %c0_9 = arith.constant 0 : index
    %c0_10 = arith.constant 0 : index
    %15 = vector.load %arg4[%c0_9, %c0_10] : memref<32x2xf32, #tpu.memory_space<vmem>>, vector<32x2xf32>
    %16 = vector.broadcast %14 : vector<1x2xf32> to vector<32x2xf32>
    %17 = arith.mulf %15, %16 : vector<32x2xf32>
    %cst_11 = arith.constant dense<0.000000e+00> : vector<32xf32>
    %18 = vector.multi_reduction <add>, %17, %cst_11 [1] : vector<32x2xf32> to vector<32xf32>
    %19 = vector.shape_cast %18 : vector<32xf32> to vector<32x1xf32>
    %c0_12 = arith.constant 0 : index
    %c0_13 = arith.constant 0 : index
    %20 = vector.load %arg5[%c0_12, %c0_13] : memref<32x1xf32, #tpu.memory_space<vmem>>, vector<32x1xf32>
    %21 = arith.addf %19, %20 : vector<32x1xf32>
    %22 = arith.negf %21 : vector<32x1xf32>
    %23 = math.exp %22 : vector<32x1xf32>
    %cst_14 = arith.constant 1.000000e+00 : f32
    %24 = vector.broadcast %cst_14 : f32 to vector<32x1xf32>
    %25 = arith.addf %24, %23 : vector<32x1xf32>
    %26 = arith.divf %24, %25 : vector<32x1xf32>
    %c0_15 = arith.constant 0 : index
    %c0_16 = arith.constant 0 : index
    %27 = vector.load %arg6[%c0_15, %c0_16] : memref<32x1xf32, #tpu.memory_space<vmem>>, vector<32x1xf32>
    %28 = vector.broadcast %27 : vector<32x1xf32> to vector<32x256xf32>
    %29 = arith.mulf %28, %1 : vector<32x256xf32>
    %cst_17 = arith.constant dense<0.000000e+00> : vector<256xf32>
    %30 = vector.multi_reduction <add>, %29, %cst_17 [0] : vector<32x256xf32> to vector<256xf32>
    %31 = vector.shape_cast %30 : vector<256xf32> to vector<1x256xf32>
    %c0_18 = arith.constant 0 : index
    %c0_19 = arith.constant 0 : index
    %32 = vector.load %arg7[%c0_18, %c0_19] : memref<1x1xf32, #tpu.memory_space<vmem>>, vector<1x1xf32>
    %33 = vector.broadcast %32 : vector<1x1xf32> to vector<1x256xf32>
    %34 = arith.addf %31, %33 : vector<1x256xf32>
    %35 = arith.negf %34 : vector<1x256xf32>
    %36 = math.exp %35 : vector<1x256xf32>
    %cst_20 = arith.constant 1.000000e+00 : f32
    %37 = vector.broadcast %cst_20 : f32 to vector<1x256xf32>
    %38 = arith.addf %37, %36 : vector<1x256xf32>
    %39 = arith.divf %37, %38 : vector<1x256xf32>
    %40 = vector.broadcast %26 : vector<32x1xf32> to vector<32x256xf32>
    %41 = vector.broadcast %39 : vector<1x256xf32> to vector<32x256xf32>
    %42 = arith.addf %40, %41 : vector<32x256xf32>
    %43 = arith.mulf %1, %42 : vector<32x256xf32>
    %c0_21 = arith.constant 0 : index
    %c0_22 = arith.constant 0 : index
    %c0_23 = arith.constant 0 : index
    %44 = vector.load %arg8[%c0_21, %c0_22, %c0_23] : memref<1x32x256xf32, #tpu.memory_space<vmem>>, vector<1x32x256xf32>
    %45 = vector.shape_cast %44 : vector<1x32x256xf32> to vector<32x256xf32>
    %46 = vector.shape_cast %43 : vector<32x256xf32> to vector<1x32x256xf32>
    tpu.vector_store %arg8[%c0_21, %c0_22, %c0_23], %46 {strides = array<i32>} : memref<1x32x256xf32, #tpu.memory_space<vmem>>, vector<1x32x256xf32>,
    return
  }
  func.func @transform_0(%arg0: i32) -> (i32, i32, i32) {
    %c0_i32 = arith.constant 0 : i32
    %c0_i32_0 = arith.constant 0 : i32
    %c0_i32_1 = arith.constant 0 : i32
    return %arg0, %c0_i32, %c0_i32_0 : i32, i32, i32
  }
  func.func @transform_1(%arg0: i32) -> (i32, i32) {
    %c0_i32 = arith.constant 0 : i32
    %c0_i32_0 = arith.constant 0 : i32
    %c0_i32_1 = arith.constant 0 : i32
    return %c0_i32, %c0_i32_0 : i32, i32
  }
  func.func @transform_2(%arg0: i32) -> (i32, i32) {
    %c0_i32 = arith.constant 0 : i32
    %c0_i32_0 = arith.constant 0 : i32
    %c0_i32_1 = arith.constant 0 : i32
    return %c0_i32, %c0_i32_0 : i32, i32
  }
  func.func @transform_3(%arg0: i32) -> (i32, i32) {
    %c0_i32 = arith.constant 0 : i32
    %c0_i32_0 = arith.constant 0 : i32
    %c0_i32_1 = arith.constant 0 : i32
    return %c0_i32, %c0_i32_0 : i32, i32
  }
  func.func @transform_4(%arg0: i32) -> (i32, i32) {
    %c0_i32 = arith.constant 0 : i32
    %c0_i32_0 = arith.constant 0 : i32
    %c0_i32_1 = arith.constant 0 : i32
    return %c0_i32, %c0_i32_0 : i32, i32
  }
  func.func @transform_5(%arg0: i32) -> (i32, i32) {
    %c0_i32 = arith.constant 0 : i32
    %c0_i32_0 = arith.constant 0 : i32
    %c0_i32_1 = arith.constant 0 : i32
    return %c0_i32, %c0_i32_0 : i32, i32
  }
  func.func @transform_6(%arg0: i32) -> (i32, i32) {
    %c0_i32 = arith.constant 0 : i32
    %c0_i32_0 = arith.constant 0 : i32
    %c0_i32_1 = arith.constant 0 : i32
    return %c0_i32, %c0_i32_0 : i32, i32
  }
  func.func @transform_7(%arg0: i32) -> (i32, i32, i32) {
    %c0_i32 = arith.constant 0 : i32
    %c0_i32_0 = arith.constant 0 : i32
    %c0_i32_1 = arith.constant 0 : i32
    return %arg0, %c0_i32, %c0_i32_0 : i32, i32, i32
  }
}

</mosaic_0001>

<llo_original>
// kernel: scse_pallas.1
$region0: #{scse_pallas.1}
  #allocation0 [shape = 'u32[]', space=smem, size = 0x4, offset = 0x4, fixed_abs, tag = 'smem constant byte address 0x4 - core index']
  #allocation1 [shape = 'u32[144,128]{1,0:T(1,128)}', space=vmem, size = 0x12000, scoped, tag = 'internal scratch']
  #allocation2 [shape = 'f32[1,1]{1,0:T(1,128)S(1)}', space=vmem, size = 0x200, scoped, tag = 'scoped memory for scse_pallas.1']
  %s0 = inlined_call_operand.vmem [shape: f32[2,32,256], index: 0, kind: input, shape index: {}]
  %s1 = inlined_call_operand.vmem [shape: f32[32,2], index: 1, kind: input, shape index: {}]
  %s2 = inlined_call_operand.vmem [shape: f32[1,2], index: 2, kind: input, shape index: {}]
  %s3 = inlined_call_operand.vmem [shape: f32[32,2], index: 3, kind: input, shape index: {}]
  %s4 = inlined_call_operand.vmem [shape: f32[32,1], index: 4, kind: input, shape index: {}]
  %s5 = inlined_call_operand.vmem [shape: f32[32,1], index: 5, kind: input, shape index: {}]
  %s6 = inlined_call_operand.<no memory space> [shape: f32[1,1], index: 6, kind: input, shape index: {}]
  %s7 = inlined_call_operand.vmem [shape: f32[2,32,256], index: 7, kind: output, shape index: {}]
  %s8 = sld [smem:[#allocation0]]
  $region61: #{scse_pallas.1} parent=0
    _
  %s10 = ssub.s32 1, %s8
  %s11 = scalar_select 0, %s10, %s8
  %v12 = vstv %s6
  %13 = vst [vmem:[#allocation2] sm:$0x1] %v12
  loop: start=0, step=1, limit=4
  $region2: #{scse_pallas.1} parent=0 // loop_pre_header
    _
  $region3: #{scse_pallas.1} parent=0 // loop_header
    %s15 = sphi 0, %s19
    %p16 = scmp.ge.s32.totalorder %s15, 4
    %s25 = sphi 0, %s27
    %s28 = sphi 0, %s25
    %s29 = sphi 0, %s28
    %s45 = sphi 0, %s29
    %s49 = sphi 0, %s49
    %s51 = sphi 0, %s49
    %s52 = sphi 0, %s51
    %s66 = sphi 0, %s52
    %s70 = sphi 0, %s70
    %s72 = sphi 0, %s70
    %s73 = sphi 0, %s72
    %s87 = sphi 0, %s73
    %s91 = sphi 0, %s91
    %s93 = sphi 0, %s91
    %s94 = sphi 0, %s93
    %s108 = sphi 0, %s94
    %s112 = sphi 0, %s112
    %s114 = sphi 0, %s112
    %s115 = sphi 0, %s114
    %s129 = sphi 0, %s115
    %s133 = sphi 0, %s133
    %s135 = sphi 0, %s133
    %s136 = sphi 0, %s135
    %s150 = sphi 0, %s136
    %s154 = sphi 0, %s154
    %s156 = sphi 0, %s154
    %s157 = sphi 0, %s156
    %s171 = sphi 0, %s157
    %s177 = sphi 0, %s179
    %s180 = sphi 0, %s177
    %s181 = sphi 0, %s180
    %s197 = sphi 0, %s181
  $region4: #{scse_pallas.1} parent=0 // loop_header_branch
    %18 = sbr.rel (%p16) target = $region8
  $region5: #{scse_pallas.1} parent=0 // loop_body
    %s20 = ssub.s32 %s15, 1
    %s21 = ssub.s32 %s15, 2
    %s22 = sadd.s32 %s15, 1
    %s23 = ssub.s32 %s15, %s22
    %p24 = scmp.eq.s32.totalorder %s23, 0
    %s26 = sadd.s32 %s25, 1
    %s27 = scalar_select %p24, %s25, %s26
    %p30 = pneg %p24
    %p31 = scmp.eq.s32.totalorder %s15, 1
    %p32 = por %p30, %p31
    %p33 = scmp.ne.s32.totalorder %s25, %s28
    %p34 = scmp.eq.s32.totalorder %s15, 0
    %p35 = por %p33, %p34
    %p36 = scmp.ne.s32.totalorder %s25, %s28
    %p37 = scmp.eq.s32.totalorder %s20, 1
    %p38 = por %p36, %p37
    %p39 = scmp.ne.s32.totalorder %s28, %s29
    %p40 = scmp.eq.s32.totalorder %s20, 0
    %p41 = por %p39, %p40
    %p42 = scmp.ne.s32.totalorder %s28, %s29
    %p43 = scmp.eq.s32.totalorder %s21, 1
    %p44 = por %p42, %p43
    %p46 = scmp.ne.s32.totalorder %s29, %s45
    %p47 = scmp.eq.s32.totalorder %s21, 0
    %p48 = por %p46, %p47
    %s50 = sadd.s32 %s49, 1
    %p53 = scmp.eq.s32.totalorder %s15, 1
    %p54 = scmp.ne.s32.totalorder %s49, %s51
    %p55 = scmp.eq.s32.totalorder %s15, 0
    %p56 = por %p54, %p55
    %p57 = scmp.ne.s32.totalorder %s49, %s51
    %p58 = scmp.eq.s32.totalorder %s20, 1
    %p59 = por %p57, %p58
    %p60 = scmp.ne.s32.totalorder %s51, %s52
    %p61 = scmp.eq.s32.totalorder %s20, 0
    %p62 = por %p60, %p61
    %p63 = scmp.ne.s32.totalorder %s51, %s52
    %p64 = scmp.eq.s32.totalorder %s21, 1
    %p65 = por %p63, %p64
    %p67 = scmp.ne.s32.totalorder %s52, %s66
    %p68 = scmp.eq.s32.totalorder %s21, 0
    %p69 = por %p67, %p68
    %s71 = sadd.s32 %s70, 1
    %p74 = scmp.eq.s32.totalorder %s15, 1
    %p75 = scmp.ne.s32.totalorder %s70, %s72
    %p76 = scmp.eq.s32.totalorder %s15, 0
    %p77 = por %p75, %p76
    %p78 = scmp.ne.s32.totalorder %s70, %s72
    %p79 = scmp.eq.s32.totalorder %s20, 1
    %p80 = por %p78, %p79
    %p81 = scmp.ne.s32.totalorder %s72, %s73
    %p82 = scmp.eq.s32.totalorder %s20, 0
    %p83 = por %p81, %p82
    %p84 = scmp.ne.s32.totalorder %s72, %s73
    %p85 = scmp.eq.s32.totalorder %s21, 1
    %p86 = por %p84, %p85
    %p88 = scmp.ne.s32.totalorder %s73, %s87
    %p89 = scmp.eq.s32.totalorder %s21, 0
    %p90 = por %p88, %p89
    %s92 = sadd.s32 %s91, 1
    %p95 = scmp.eq.s32.totalorder %s15, 1
    %p96 = scmp.ne.s32.totalorder %s91, %s93
    %p97 = scmp.eq.s32.totalorder %s15, 0
    %p98 = por %p96, %p97
    %p99 = scmp.ne.s32.totalorder %s91, %s93
    %p100 = scmp.eq.s32.totalorder %s20, 1
    %p101 = por %p99, %p100
    %p102 = scmp.ne.s32.totalorder %s93, %s94
    %p103 = scmp.eq.s32.totalorder %s20, 0
    %p104 = por %p102, %p103
    %p105 = scmp.ne.s32.totalorder %s93, %s94
    %p106 = scmp.eq.s32.totalorder %s21, 1
    %p107 = por %p105, %p106
    %p109 = scmp.ne.s32.totalorder %s94, %s108
    %p110 = scmp.eq.s32.totalorder %s21, 0
    %p111 = por %p109, %p110
    %s113 = sadd.s32 %s112, 1
    %p116 = scmp.eq.s32.totalorder %s15, 1
    %p117 = scmp.ne.s32.totalorder %s112, %s114
    %p118 = scmp.eq.s32.totalorder %s15, 0
    %p119 = por %p117, %p118
    %p120 = scmp.ne.s32.totalorder %s112, %s114
    %p121 = scmp.eq.s32.totalorder %s20, 1
    %p122 = por %p120, %p121
    %p123 = scmp.ne.s32.totalorder %s114, %s115
    %p124 = scmp.eq.s32.totalorder %s20, 0
    %p125 = por %p123, %p124
    %p126 = scmp.ne.s32.totalorder %s114, %s115
    %p127 = scmp.eq.s32.totalorder %s21, 1
    %p128 = por %p126, %p127
    %p130 = scmp.ne.s32.totalorder %s115, %s129
    %p131 = scmp.eq.s32.totalorder %s21, 0
    %p132 = por %p130, %p131
    %s134 = sadd.s32 %s133, 1
    %p137 = scmp.eq.s32.totalorder %s15, 1
    %p138 = scmp.ne.s32.totalorder %s133, %s135
    %p139 = scmp.eq.s32.totalorder %s15, 0
    %p140 = por %p138, %p139
    %p141 = scmp.ne.s32.totalorder %s133, %s135
    %p142 = scmp.eq.s32.totalorder %s20, 1
    %p143 = por %p141, %p142
    %p144 = scmp.ne.s32.totalorder %s135, %s136
    %p145 = scmp.eq.s32.totalorder %s20, 0
    %p146 = por %p144, %p145
    %p147 = scmp.ne.s32.totalorder %s135, %s136
    %p148 = scmp.eq.s32.totalorder %s21, 1
    %p149 = por %p147, %p148
    %p151 = scmp.ne.s32.totalorder %s136, %s150
    %p152 = scmp.eq.s32.totalorder %s21, 0
    %p153 = por %p151, %p152
    %s155 = sadd.s32 %s154, 1
    %p158 = scmp.eq.s32.totalorder %s15, 1
    %p159 = scmp.ne.s32.totalorder %s154, %s156
    %p160 = scmp.eq.s32.totalorder %s15, 0
    %p161 = por %p159, %p160
    %p162 = scmp.ne.s32.totalorder %s154, %s156
    %p163 = scmp.eq.s32.totalorder %s20, 1
    %p164 = por %p162, %p163
    %p165 = scmp.ne.s32.totalorder %s156, %s157
    %p166 = scmp.eq.s32.totalorder %s20, 0
    %p167 = por %p165, %p166
    %p168 = scmp.ne.s32.totalorder %s156, %s157
    %p169 = scmp.eq.s32.totalorder %s21, 1
    %p170 = por %p168, %p169
    %p172 = scmp.ne.s32.totalorder %s157, %s171
    %p173 = scmp.eq.s32.totalorder %s21, 0
    %p174 = por %p172, %p173
    %s175 = ssub.s32 %s15, %s22
    %p176 = scmp.eq.s32.totalorder %s175, 0
    %s178 = sadd.s32 %s177, 1
    %s179 = scalar_select %p176, %s177, %s178
    %p182 = pneg %p176
    %p183 = scmp.eq.s32.totalorder %s15, 1
    %p184 = por %p182, %p183
    %p185 = scmp.ne.s32.totalorder %s177, %s180
    %p186 = scmp.eq.s32.totalorder %s15, 0
    %p187 = por %p185, %p186
    %p188 = scmp.ne.s32.totalorder %s177, %s180
    %p189 = scmp.eq.s32.totalorder %s20, 1
    %p190 = por %p188, %p189
    %p191 = scmp.ne.s32.totalorder %s180, %s181
    %p192 = scmp.eq.s32.totalorder %s20, 0
    %p193 = por %p191, %p192
    %p194 = scmp.ne.s32.totalorder %s180, %s181
    %p195 = scmp.eq.s32.totalorder %s21, 1
    %p196 = por %p194, %p195
    %p198 = scmp.ne.s32.totalorder %s181, %s197
    %p199 = scmp.eq.s32.totalorder %s21, 0
    %p200 = por %p198, %p199
    %p201 = scmp.le.s32.totalorder 1, %s15
    %p202 = scmp.lt.s32.totalorder %s15, 3
    %p203 = pnand %p201, %p202
    %p204 = pneg %p203
    // Predicated region
    $region9: #{scse_pallas.1} parent=5 // pred_check
      _
    $region10: #{scse_pallas.1} parent=5 // pred_check_branch
      %206 = sbr.rel (%p203) target = $region12
    $region11: #{scse_pallas.1} parent=5 // pred_region
      %s207 = ssub.s32 %s15, 1
      // Predicated region
      $region13: #{scse_pallas.1} parent=11 // pred_check
        %p208 = pneg %p62
      $region14: #{scse_pallas.1} parent=11 // pred_check_branch
        %210 = sbr.rel (%p208) target = $region16
      $region15: #{scse_pallas.1} parent=11 // pred_region
        _
      $region16: #{scse_pallas.1} parent=11 // pred_fallthru
        _
      // Predicated region
      $region17: #{scse_pallas.1} parent=11 // pred_check
        %p211 = pneg %p83
      $region18: #{scse_pallas.1} parent=11 // pred_check_branch
        %213 = sbr.rel (%p211) target = $region20
      $region19: #{scse_pallas.1} parent=11 // pred_region
        _
      $region20: #{scse_pallas.1} parent=11 // pred_fallthru
        _
      // Predicated region
      $region21: #{scse_pallas.1} parent=11 // pred_check
        %p214 = pneg %p104
      $region22: #{scse_pallas.1} parent=11 // pred_check_branch
        %216 = sbr.rel (%p214) target = $region24
      $region23: #{scse_pallas.1} parent=11 // pred_region
        _
      $region24: #{scse_pallas.1} parent=11 // pred_fallthru
        _
      // Predicated region
      $region25: #{scse_pallas.1} parent=11 // pred_check
        %p217 = pneg %p125
      $region26: #{scse_pallas.1} parent=11 // pred_check_branch
        %219 = sbr.rel (%p217) target = $region28
      $region27: #{scse_pallas.1} parent=11 // pred_region
        _
      $region28: #{scse_pallas.1} parent=11 // pred_fallthru
        _
      // Predicated region
      $region29: #{scse_pallas.1} parent=11 // pred_check
        %p220 = pneg %p146
      $region30: #{scse_pallas.1} parent=11 // pred_check_branch
        %222 = sbr.rel (%p220) target = $region32
      $region31: #{scse_pallas.1} parent=11 // pred_region
        _
      $region32: #{scse_pallas.1} parent=11 // pred_fallthru
        _
      // Predicated region
      $region33: #{scse_pallas.1} parent=11 // pred_check
        %p223 = pneg %p167
      $region34: #{scse_pallas.1} parent=11 // pred_check_branch
        %225 = sbr.rel (%p223) target = $region36
      $region35: #{scse_pallas.1} parent=11 // pred_region
        _
      $region36: #{scse_pallas.1} parent=11 // pred_fallthru
        _
    $region12: #{scse_pallas.1} parent=5 // pred_fallthru
      _
    %p226 = scmp.lt.s32.totalorder %s15, 2
    // Predicated region
    $region37: #{scse_pallas.1} parent=5 // pred_check
      %p227 = pneg %p226
    $region38: #{scse_pallas.1} parent=5 // pred_check_branch
      %229 = sbr.rel (%p227) target = $region40
    $region39: #{scse_pallas.1} parent=5 // pred_region
      // Predicated region
      $region41: #{scse_pallas.1} parent=39 // pred_check
        %p230 = pneg %p35
      $region42: #{scse_pallas.1} parent=39 // pred_check_branch
        %232 = sbr.rel (%p230) target = $region44
      $region43: #{scse_pallas.1} parent=39 // pred_region
        %p233 = scmp.lt.s32.totalorder %s15, 1
        %s234 = scalar_select %p233, %s15, 1
        %s235 = smul.addr %s234, 8
        %s236 = smul.addr %s235, 8
        %s237 = scalar_lea.vmem %s0, %s236
      $region44: #{scse_pallas.1} parent=39 // pred_fallthru
        _
    $region40: #{scse_pallas.1} parent=5 // pred_fallthru
      _
    %p238 = scmp.le.s32.totalorder 1, %s15
    %p239 = scmp.lt.s32.totalorder %s15, 3
    %p240 = pnand %p238, %p239
    %p241 = pneg %p240
    // Predicated region
    $region45: #{scse_pallas.1} parent=5 // pred_check
      _
    $region46: #{scse_pallas.1} parent=5 // pred_check_branch
      %243 = sbr.rel (%p240) target = $region48
    $region47: #{scse_pallas.1} parent=5 // pred_region
      %s244 = ssub.s32 %s15, 1
      %p245 = scmp.lt.s32.totalorder %s20, 1
      %s246 = scalar_select %p245, %s20, 1
      %s247 = smul.addr %s246, 8
      %s248 = smul.addr %s247, 8
      %s249 = scalar_lea.vmem %s0, %s248
      %p250 = pneg %p41
      %p251 = pneg %p38
      %p252 = pneg %p62
      %p253 = pneg %p59
      %p254 = pneg %p83
      %p255 = pneg %p80
      %p256 = pneg %p104
      %p257 = pneg %p101
      %p258 = pneg %p125
      %p259 = pneg %p122
      %p260 = pneg %p146
      %p261 = pneg %p143
      %p262 = pneg %p167
      %p263 = pneg %p164
      %p264 = pneg %p193
      %p265 = pneg %p190
      %p266 = scmp.lt.s32.totalorder %s20, 1
      %s267 = scalar_select %p266, %s20, 1
      %s268 = smul.addr %s267, 8
      %s269 = smul.addr %s268, 8
      %s270 = scalar_lea.vmem %s7, %s269
      %p271 = scmp.lt.s32.totalorder %s20, 1
      %s272 = scalar_select %p271, %s20, 1
      %s273 = smul.addr %s272, 8
      %s274 = smul.addr %s273, 8
      %s275 = scalar_lea.vmem %s0, %s274
      %p276 = scmp.lt.s32.totalorder %s20, 1
      %s277 = scalar_select %p276, %s20, 1
      %s278 = smul.addr %s277, 8
      %s279 = smul.addr %s278, 8
      %s280 = scalar_lea.vmem %s7, %s279
      %v281 = vld [vmem:[%s275] sm:$0xff]
      %v282 = vld [vmem:[%s275 + $0x8] sm:$0xff]
      %v283 = vld [vmem:[%s275 + $0x10] sm:$0xff]
      %v284 = vld [vmem:[%s275 + $0x18] sm:$0xff]
      %v285 = vld [vmem:[%s275 + $0x20] sm:$0xff]
      %v286 = vld [vmem:[%s275 + $0x28] sm:$0xff]
      %v287 = vld [vmem:[%s275 + $0x30] sm:$0xff]
      %v288 = vld [vmem:[%s275 + $0x38] sm:$0xff]
      %v289 = vadd.f32 %v281, %v282
      %290 = vadd.xlane.f32.xlu0 %v289
      %v291 = vpop.xlane.xlu0 %290
      %v292 = vadd.f32 %v283, %v284
      %293 = vadd.xlane.f32.xlu0 %v292
      %v294 = vpop.xlane.xlu0 %293
      %v295 = vadd.f32 %v285, %v286
      %296 = vadd.xlane.f32.xlu0 %v295
      %v297 = vpop.xlane.xlu0 %296
      %v298 = vadd.f32 %v287, %v288
      %299 = vadd.xlane.f32.xlu0 %v298
      %v300 = vpop.xlane.xlu0 %299
      %v301 = vrcp.pop 256.0
      %v302 = vmul.f32 %v291, %v301
      %v303 = vmul.f32 %v294, %v301
      %v304 = vmul.f32 %v297, %v301
      %v305 = vmul.f32 %v300, %v301
      %v306 = vld [vmem:[%s1] sm:$0xff]
      %v307 = vld [vmem:[%s1 + $0x8] sm:$0xff]
      %v308 = vld [vmem:[%s1 + $0x10] sm:$0xff]
      %v309 = vld [vmem:[%s1 + $0x18] sm:$0xff]
      %v310 = vmul.f32 %v306, %v302
      %v311 = vmul.f32 %v307, %v303
      %v312 = vmul.f32 %v308, %v304
      %v313 = vmul.f32 %v309, %v305
      %vm314 = vcmask 15360
      %v315 = vsel %vm314, %v310, 0.0
      %v316 = vsel %vm314, %v311, 0.0
      %v317 = vadd.f32 %v315, %v316
      %v318 = vsel %vm314, %v312, 0.0
      %v319 = vadd.f32 %v317, %v318
      %v320 = vsel %vm314, %v313, 0.0
      %v321 = vadd.f32 %v319, %v320
      %v322 = vrot.slane %v321, 4
      %v323 = vadd.f32 %v321, %v322
      %v324 = vrot.slane %v323, 2
      %v325 = vadd.f32 %v323, %v324
      %v326 = vrot.slane %v325, 1
      %v327 = vadd.f32 %v325, %v326
      %v328 = vld [vmem:[%s2] sm:$0x1]
      %v329 = vadd.f32 %v327, %v328
      %v330 = vmax.f32 %v329, 0.0
      %v331 = vld [vmem:[%s3] sm:$0xff]
      %v332 = vld [vmem:[%s3 + $0x8] sm:$0xff]
      %v333 = vld [vmem:[%s3 + $0x10] sm:$0xff]
      %v334 = vld [vmem:[%s3 + $0x18] sm:$0xff]
      %v335 = vlaneseq
      %v336 = vshrl.u32 %v335, 7
      %v337 = vsub.s32 0, %v336
      %v338 = vrot.slane %v330, %v337
      %v339 = vmul.f32 %v331, %v338
      %v340 = vmul.f32 %v332, %v338
      %v341 = vmul.f32 %v333, %v338
      %v342 = vmul.f32 %v334, %v338
      %v343 = vsel %vm314, %v339, 0.0
      %344 = vadd.xlane.f32.xlu0 %v343
      %v345 = vpop.xlane.xlu0 %344
      %v346 = vsel %vm314, %v340, 0.0
      %347 = vadd.xlane.f32.xlu0 %v346
      %v348 = vpop.xlane.xlu0 %347
      %v349 = vsel %vm314, %v341, 0.0
      %350 = vadd.xlane.f32.xlu0 %v349
      %v351 = vpop.xlane.xlu0 %350
      %v352 = vsel %vm314, %v342, 0.0
      %353 = vadd.xlane.f32.xlu0 %v352
      %v354 = vpop.xlane.xlu0 %353
      %v355 = vld [vmem:[%s4] sm:$0xff]
      %v356 = vld [vmem:[%s4 + $0x8] sm:$0xff]
      %v357 = vld [vmem:[%s4 + $0x10] sm:$0xff]
      %v358 = vld [vmem:[%s4 + $0x18] sm:$0xff]
      %v359 = vadd.f32 %v345, %v355
      %v360 = vadd.f32 %v348, %v356
      %v361 = vadd.f32 %v351, %v357
      %v362 = vadd.f32 %v354, %v358
      %v363 = vxor.u32 %v359, 2147483648
      %v364 = vxor.u32 %v360, 2147483648
      %v365 = vxor.u32 %v361, 2147483648
      %v366 = vxor.u32 %v362, 2147483648
      %v367 = vmul.f32 %v363, 1.442695
      %v368 = vpow.pop %v367
      %v369 = vmul.f32 %v364, 1.442695
      %v370 = vpow.pop %v369
      %v371 = vmul.f32 %v365, 1.442695
      %v372 = vpow.pop %v371
      %v373 = vmul.f32 %v366, 1.442695
      %v374 = vpow.pop %v373
      %v375 = vadd.f32 %v368, 1.0
      %v376 = vadd.f32 %v370, 1.0
      %v377 = vadd.f32 %v372, 1.0
      %v378 = vadd.f32 %v374, 1.0
      %v379 = vrcp.pop %v375
      %v380 = vmul.f32 1.0, %v379
      %v381 = vrcp.pop %v376
      %v382 = vmul.f32 1.0, %v381
      %v383 = vrcp.pop %v377
      %v384 = vmul.f32 1.0, %v383
      %v385 = vrcp.pop %v378
      %v386 = vmul.f32 1.0, %v385
      %v387 = vld [vmem:[%s5] sm:$0xff]
      %v388 = vld [vmem:[%s5 + $0x8] sm:$0xff]
      %v389 = vld [vmem:[%s5 + $0x10] sm:$0xff]
      %v390 = vld [vmem:[%s5 + $0x18] sm:$0xff]
      %392 = vset.pattern.permute.xlu0 0
      %393 = vperm.xlu0 %392, %v387
      %v394 = vpop.permute.xlu0 %393
      %397 = vset.pattern.permute.xlu0 0
      %398 = vperm.xlu0 %397, %v388
      %v399 = vpop.permute.xlu0 %398
      %402 = vset.pattern.permute.xlu0 0
      %403 = vperm.xlu0 %402, %v389
      %v404 = vpop.permute.xlu0 %403
      %407 = vset.pattern.permute.xlu0 0
      %408 = vperm.xlu0 %407, %v390
      %v409 = vpop.permute.xlu0 %408
      %v411 = vmul.f32 %v394, %v281
      %v412 = vmul.f32 %v394, %v282
      %v413 = vmul.f32 %v399, %v283
      %v414 = vmul.f32 %v399, %v284
      %v415 = vmul.f32 %v404, %v285
      %v416 = vmul.f32 %v404, %v286
      %v417 = vmul.f32 %v409, %v287
      %v418 = vmul.f32 %v409, %v288
      %v419 = vadd.f32 %v411, %v413
      %v420 = vadd.f32 %v419, %v415
      %v421 = vadd.f32 %v420, %v417
      %v422 = vrot.slane %v421, 4
      %v423 = vadd.f32 %v421, %v422
      %v424 = vrot.slane %v423, 2
      %v425 = vadd.f32 %v423, %v424
      %v426 = vrot.slane %v425, 1
      %v427 = vadd.f32 %v425, %v426
      %v428 = vadd.f32 %v412, %v414
      %v429 = vadd.f32 %v428, %v416
      %v430 = vadd.f32 %v429, %v418
      %v431 = vrot.slane %v430, 4
      %v432 = vadd.f32 %v430, %v431
      %v433 = vrot.slane %v432, 2
      %v434 = vadd.f32 %v432, %v433
      %v435 = vrot.slane %v434, 1
      %v436 = vadd.f32 %v434, %v435
      %v437 = vld [vmem:[#allocation2] sm:$0x1]
      %439 = vset.pattern.permute.xlu0 0
      %440 = vperm.xlu0 %439, %v437
      %v441 = vpop.permute.xlu0 %440
      %v443 = vlaneseq
      %v444 = vshrl.u32 %v443, 7
      %v445 = vsub.s32 0, %v444
      %v446 = vrot.slane %v441, %v445
      %v447 = vadd.f32 %v427, %v446
      %v448 = vadd.f32 %v436, %v446
      %v449 = vxor.u32 %v447, 2147483648
      %v450 = vxor.u32 %v448, 2147483648
      %v451 = vmul.f32 %v449, 1.442695
      %v452 = vpow.pop %v451
      %v453 = vmul.f32 %v450, 1.442695
      %v454 = vpow.pop %v453
      %v455 = vadd.f32 %v452, 1.0
      %v456 = vadd.f32 %v454, 1.0
      %v457 = vrcp.pop %v455
      %v458 = vmul.f32 1.0, %v457
      %v459 = vrcp.pop %v456
      %v460 = vmul.f32 1.0, %v459
      %462 = vset.pattern.permute.xlu0 0
      %463 = vperm.xlu0 %462, %v380
      %v464 = vpop.permute.xlu0 %463
      %467 = vset.pattern.permute.xlu0 0
      %468 = vperm.xlu0 %467, %v382
      %v469 = vpop.permute.xlu0 %468
      %472 = vset.pattern.permute.xlu0 0
      %473 = vperm.xlu0 %472, %v384
      %v474 = vpop.permute.xlu0 %473
      %477 = vset.pattern.permute.xlu0 0
      %478 = vperm.xlu0 %477, %v386
      %v479 = vpop.permute.xlu0 %478
      %v481 = vadd.f32 %v464, %v458
      %v482 = vadd.f32 %v464, %v460
      %v483 = vadd.f32 %v469, %v458
      %v484 = vadd.f32 %v469, %v460
      %v485 = vadd.f32 %v474, %v458
      %v486 = vadd.f32 %v474, %v460
      %v487 = vadd.f32 %v479, %v458
      %v488 = vadd.f32 %v479, %v460
      %v489 = vmul.f32 %v281, %v481
      %v490 = vmul.f32 %v282, %v482
      %v491 = vmul.f32 %v283, %v483
      %v492 = vmul.f32 %v284, %v484
      %v493 = vmul.f32 %v285, %v485
      %v494 = vmul.f32 %v286, %v486
      %v495 = vmul.f32 %v287, %v487
      %v496 = vmul.f32 %v288, %v488
      %497 = vst [vmem:[%s280] sm:$0xff] %v489
      %498 = vst [vmem:[%s280 + $0x8] sm:$0xff] %v490
      %499 = vst [vmem:[%s280 + $0x10] sm:$0xff] %v491
      %500 = vst [vmem:[%s280 + $0x18] sm:$0xff] %v492
      %501 = vst [vmem:[%s280 + $0x20] sm:$0xff] %v493
      %502 = vst [vmem:[%s280 + $0x28] sm:$0xff] %v494
      %503 = vst [vmem:[%s280 + $0x30] sm:$0xff] %v495
      %504 = vst [vmem:[%s280 + $0x38] sm:$0xff] %v496
      %p505 = scmp.lt.s32.totalorder %s20, 1
      %s506 = scalar_select %p505, %s20, 1
      %s507 = smul.addr %s506, 8
      %s508 = smul.addr %s507, 8
      %s509 = scalar_lea.vmem %s7, %s508
      // Predicated region
      $region49: #{scse_pallas.1} parent=47 // pred_check
        %p510 = pneg %p190
      $region50: #{scse_pallas.1} parent=47 // pred_check_branch
        %512 = sbr.rel (%p510) target = $region52
      $region51: #{scse_pallas.1} parent=47 // pred_region
        _
      $region52: #{scse_pallas.1} parent=47 // pred_fallthru
        _
    $region48: #{scse_pallas.1} parent=5 // pred_fallthru
      _
    %p513 = scmp.le.s32.totalorder 2, %s15
    // Predicated region
    $region53: #{scse_pallas.1} parent=5 // pred_check
      %p514 = pneg %p513
    $region54: #{scse_pallas.1} parent=5 // pred_check_branch
      %516 = sbr.rel (%p514) target = $region56
    $region55: #{scse_pallas.1} parent=5 // pred_region
      %s517 = ssub.s32 %s15, 2
      // Predicated region
      $region57: #{scse_pallas.1} parent=55 // pred_check
        %p518 = pneg %p196
      $region58: #{scse_pallas.1} parent=55 // pred_check_branch
        %520 = sbr.rel (%p518) target = $region60
      $region59: #{scse_pallas.1} parent=55 // pred_region
        %p521 = scmp.lt.s32.totalorder %s21, 1
        %s522 = scalar_select %p521, %s21, 1
        %s523 = smul.addr %s522, 8
        %s524 = smul.addr %s523, 8
        %s525 = scalar_lea.vmem %s7, %s524
      $region60: #{scse_pallas.1} parent=55 // pred_fallthru
        _
    $region56: #{scse_pallas.1} parent=5 // pred_fallthru
      _
  $region6: #{scse_pallas.1} parent=0 // loop_footer
    %s19 = sadd.s32 1, %s15
  $region7: #{scse_pallas.1} parent=0 // loop_footer_branch
    %14 = sbr.rel target = $region3
  $region8: #{scse_pallas.1} parent=0 // loop_exit
    _

</llo_original>
